<compile_context>
chip_gen: v7x
topology: tpu7x:2x2x1
jax: 0.10.0
libtpu: 0.0.40
codegen_flags: <defaults>
</compile_context>

<pallas_src>
import math

import jax
import jax.numpy as jnp
from jax.experimental import pallas as pl
from jax.experimental.pallas import tpu as pltpu

HIDDEN = 128


def _round_up(x, m):
    return (x + m - 1) // m * m


def _pick_epilogue_dtype(compute_dtype):
    """bf16 epilogue only on parts with a bf16 VPU (v6e / v7x); f32 otherwise."""
    try:
        kind = jax.devices()[0].device_kind.lower()
    except Exception:
        return jnp.float32
    if any(tag in kind for tag in ("v6", "v7", "tpu7")):
        return compute_dtype
    return jnp.float32


def _reinforce_kernel(x_ref, w1_ref, b1_ref, w2_ref, b2_ref, w3_ref, b3_ref,
                      w4_ref, epi_ref, o_ref):
    """One batch tile: x[TILE_B, F] (f32) -> o[1, 1, TILE_B] (batch on lanes)."""
    cdt = w1_ref.dtype          # matmul operand dtype (bf16)
    edt = b1_ref.dtype          # epilogue dtype (bf16 on v6e/v7x, f32 on older parts)

    # Cast f32 -> bf16 in-kernel (no wrapper-side HBM pass over state).
    x = x_ref[...].astype(cdt)                                  # [TB, F]

    def layer(a, w_ref, b_ref):
        # MXU accumulates in f32; bias-add + ReLU in `edt`; operands for the
        # next matmul in `cdt`.
        z = jnp.dot(a, w_ref[...], preferred_element_type=jnp.float32)
        return jnp.maximum(z.astype(edt) + b_ref[...], 0).astype(cdt)

    h = layer(x, w1_ref, b1_ref)                                # [TB, 128]
    h = layer(h, w2_ref, b2_ref)                                # [TB, 128]
    h = layer(h, w3_ref, b3_ref)                                # [TB, 128]

    # Layer 4 (128 -> 1): contract the hidden dim of both operands so the
    # result is [1, TILE_B] with the batch on the lane axis -> unmasked,
    # lane-dense stores instead of a 1-lane masked [TILE_B, 1] column.
    z = jax.lax.dot_general(w4_ref[...], h,
                            dimension_numbers=(((1,), (1,)), ((), ())),
                            preferred_element_type=jnp.float32)  # [1, TB]

    b4 = epi_ref[0]                                             # SMEM scalars
    price_min = epi_ref[1]
    price_delta = epi_ref[2]
    p = jax.nn.sigmoid((z + b4) * 0.001)                        # f32 epilogue, EUP
    o_ref[0] = p * price_delta + price_min                      # write [1, TB] slab


def reinforce_forward(state, params, price_min, price_max, *,
                      tile_b=None, compute_dtype=jnp.bfloat16,
                      max_tile_b=2048, min_tiles=2):
    """Pallas wrapper. state: [B, F] float32. Returns [B, 1] float32."""
    B, F = state.shape
    padded128 = _round_up(B, 128)

    if tile_b is None:
        # Largest 128-multiple tile (<= max_tile_b) that still yields >=
        # min_tiles grid steps, clamped to the padded batch so small B isn't
        # over-padded.  Large B => many 2048-row tiles (amortizes the ~600
        # cycle per-step overhead and feeds both TCs on v7x).
        target = max(128, _round_up(pl.cdiv(padded128, min_tiles), 128))
        tile_b = min(max_tile_b, target, padded128)

    n_tiles = pl.cdiv(B, tile_b)
    b_pad = n_tiles * tile_b

    x = state                              # stays f32: cast happens in-kernel
    if b_pad != B:
        x = jnp.pad(x, ((0, b_pad - B), (0, 0)))

    cdt = compute_dtype
    edt = _pick_epilogue_dtype(cdt)

    # One-time (tiny) casts of the weights/biases in the wrapper.
    w1 = params["w1"].astype(cdt)
    w2 = params["w2"].astype(cdt)
    w3 = params["w3"].astype(cdt)
    w4 = params["w4"].astype(cdt)
    b1 = params["b1"].astype(edt)
    b2 = params["b2"].astype(edt)
    b3 = params["b3"].astype(edt)

    # Scalar epilogue constants -> SMEM (runtime values: no recompile when the
    # price range changes, no padded VMEM tile for a (1,1) bias).
    epi = jnp.stack([params["b4"].reshape(()).astype(jnp.float32),
                     jnp.float32(price_min),
                     jnp.float32(price_max) - jnp.float32(price_min)])

    const2d = lambda i: (0, 0)    # weights/biases: same block every step -> resident

    out3d = pl.pallas_call(
        _reinforce_kernel,
        out_shape=jax.ShapeDtypeStruct((n_tiles, 1, tile_b), jnp.float32),
        grid=(n_tiles,),
        in_specs=[
            pl.BlockSpec((tile_b, F), lambda i: (i, 0)),        # state tile (pipelined)
            pl.BlockSpec((F, HIDDEN), const2d),                 # w1
            pl.BlockSpec((1, HIDDEN), const2d),                 # b1
            pl.BlockSpec((HIDDEN, HIDDEN), const2d),            # w2
            pl.BlockSpec((1, HIDDEN), const2d),                 # b2
            pl.BlockSpec((HIDDEN, HIDDEN), const2d),            # w3
            pl.BlockSpec((1, HIDDEN), const2d),                 # b3
            pl.BlockSpec((1, HIDDEN), const2d),                 # w4 (row form)
            pl.BlockSpec(memory_space=pltpu.MemorySpace.SMEM),  # epilogue scalars
        ],
        out_specs=pl.BlockSpec((1, 1, tile_b), lambda i: (i, 0, 0)),
        compiler_params=pltpu.CompilerParams(
            dimension_semantics=("parallel",),       # shard batch tiles across cores
            vmem_limit_bytes=32 * 1024 * 1024),      # covers big tiles on v5e's 16 MiB default
    )(x, w1, b1, w2, b2, w3, b3, w4, epi)

    # Un-pad and restore the [B, 1] layout of the torch module.
    return out3d.reshape(-1)[:B].reshape(B, 1)


def init_params(key, num_state_features):
    """Deterministic init matching torch: xavier_uniform_ weights, bias=0.01.

    Weights are stored as [in, out] (transposed from torch's [out, in]); the
    final layer is kept as a [1, 128] row and its bias as a scalar."""
    dims = [(num_state_features, HIDDEN), (HIDDEN, HIDDEN),
            (HIDDEN, HIDDEN), (HIDDEN, 1)]
    params = {}
    keys = jax.random.split(key, len(dims))
    for i, ((fan_in, fan_out), k) in enumerate(zip(dims, keys), start=1):
        bound = math.sqrt(6.0 / (fan_in + fan_out))
        w = jax.random.uniform(k, (fan_in, fan_out), jnp.float32, -bound, bound)
        if fan_out == 1:
            params[f"w{i}"] = w.reshape(1, fan_in)       # [1, 128] row
            params[f"b{i}"] = jnp.float32(0.01)          # scalar -> SMEM
        else:
            params[f"w{i}"] = w                          # [in, out]
            params[f"b{i}"] = jnp.full((1, fan_out), 0.01, jnp.float32)
    return params


def _reference(state, params, price_min, price_max):
    """Pure-f32 JAX reference (same math as the torch module)."""
    h = jnp.maximum(state @ params["w1"] + params["b1"], 0.0)
    h = jnp.maximum(h @ params["w2"] + params["b2"], 0.0)
    h = jnp.maximum(h @ params["w3"] + params["b3"], 0.0)
    z = h @ params["w4"].T + params["b4"]
    return jax.nn.sigmoid(z * 0.001) * (price_max - price_min) + price_min


if __name__ == "__main__":
    key = jax.random.PRNGKey(0)
    k_state, k_state2, k_params = jax.random.split(key, 3)

    F = 32                              # num_state_features
    price_min, price_max = 10.0, 50.0
    params = init_params(k_params, F)

    # Case 1: tiny batch (B=8) -> single 128-row tile, padded tail discarded.
    state_small = jax.random.normal(k_state, (8, F), jnp.float32)
    out_small = jax.block_until_ready(
        reinforce_forward(state_small, params, price_min, price_max))
    ref_small = _reference(state_small, params, price_min, price_max)
    assert out_small.shape == (8, 1), out_small.shape
    assert jnp.allclose(out_small, ref_small, atol=1e-2, rtol=1e-3), \
        float(jnp.max(jnp.abs(out_small - ref_small)))

    # Case 2: B=512 -> auto tile_b=256, 2 grid steps (exercises the multi-tile
    # "parallel" grid path and the no-pad path).
    state_big = jax.random.normal(k_state2, (512, F), jnp.float32)
    out_big = jax.block_until_ready(
        reinforce_forward(state_big, params, price_min, price_max))
    ref_big = _reference(state_big, params, price_min, price_max)
    assert out_big.shape == (512, 1), out_big.shape
    # bf16 matmul operands with f32 accumulation; sigmoid(z * 1e-3) squashes
    # the residual error far below 1e-2 on the price scale.
    assert jnp.allclose(out_big, ref_big, atol=1e-2, rtol=1e-3), \
        float(jnp.max(jnp.abs(out_big - ref_big)))

    print("KERNEL_OK")
</pallas_src>

<mosaic_0001>
module attributes {stable_mosaic.version = 11 : i64} {
  func.func @_reinforce_kernel(%arg0: i32, %arg1: memref<128x32xf32, #tpu.memory_space<vmem>>, %arg2: memref<32x128xbf16, #tpu.memory_space<vmem>>, %arg3: memref<1x128xf32, #tpu.memory_space<vmem>>, %arg4: memref<128x128xbf16, #tpu.memory_space<vmem>>, %arg5: memref<1x128xf32, #tpu.memory_space<vmem>>, %arg6: memref<128x128xbf16, #tpu.memory_space<vmem>>, %arg7: memref<1x128xf32, #tpu.memory_space<vmem>>, %arg8: memref<1x128xbf16, #tpu.memory_space<vmem>>, %arg9: memref<3xf32, #tpu.memory_space<smem>>, %arg10: memref<1x1x128xf32, #tpu.memory_space<vmem>>) attributes {dimension_semantics = [#tpu.dimension_semantics<parallel>], iteration_bounds = array<i64: 1>, scalar_prefetch = 0 : i64, scratch_operands = 0 : i64, tpu.core_type = #tpu.core_type<tc>, window_params = [{transform_indices = @transform_0, window_bounds = array<i64: 128, 32>}, {pipeline_mode = #tpu.pipeline_mode<synchronous>, transform_indices = @transform_1, window_bounds = array<i64: 32, 128>}, {pipeline_mode = #tpu.pipeline_mode<synchronous>, transform_indices = @transform_2, window_bounds = array<i64: 1, 128>}, {pipeline_mode = #tpu.pipeline_mode<synchronous>, transform_indices = @transform_3, window_bounds = array<i64: 128, 128>}, {pipeline_mode = #tpu.pipeline_mode<synchronous>, transform_indices = @transform_4, window_bounds = array<i64: 1, 128>}, {pipeline_mode = #tpu.pipeline_mode<synchronous>, transform_indices = @transform_5, window_bounds = array<i64: 128, 128>}, {pipeline_mode = #tpu.pipeline_mode<synchronous>, transform_indices = @transform_6, window_bounds = array<i64: 1, 128>}, {pipeline_mode = #tpu.pipeline_mode<synchronous>, transform_indices = @transform_7, window_bounds = array<i64: 1, 128>}, {transform_indices = @transform_8, window_bounds = array<i64: 3>}, {transform_indices = @transform_9, window_bounds = array<i64: 1, 1, 128>}]} {
    %c0 = arith.constant 0 : index
    %c0_0 = arith.constant 0 : index
    %0 = vector.load %arg1[%c0, %c0_0] : memref<128x32xf32, #tpu.memory_space<vmem>>, vector<128x32xf32>
    %1 = arith.truncf %0 : vector<128x32xf32> to vector<128x32xbf16>
    %c0_1 = arith.constant 0 : index
    %c0_2 = arith.constant 0 : index
    %2 = vector.load %arg2[%c0_1, %c0_2] : memref<32x128xbf16, #tpu.memory_space<vmem>>, vector<32x128xbf16>
    %cst = arith.constant dense<0.000000e+00> : vector<128x128xf32>
    %3 = tpu.matmul %1, %2, %cst {dimension_numbers = #tpu.dot_dimension_numbers<[1], [0], [0], [1], [0, 0, 1, 1], [], []>} : vector<128x32xbf16>, vector<32x128xbf16>, vector<128x128xf32> -> vector<128x128xf32>
    %c0_3 = arith.constant 0 : index
    %c0_4 = arith.constant 0 : index
    %4 = vector.load %arg3[%c0_3, %c0_4] : memref<1x128xf32, #tpu.memory_space<vmem>>, vector<1x128xf32>
    %5 = vector.broadcast %4 : vector<1x128xf32> to vector<128x128xf32>
    %6 = arith.addf %3, %5 : vector<128x128xf32>
    %cst_5 = arith.constant 0.000000e+00 : f32
    %7 = vector.broadcast %cst_5 : f32 to vector<128x128xf32>
    %8 = arith.maximumf %6, %7 : vector<128x128xf32>
    %9 = arith.truncf %8 : vector<128x128xf32> to vector<128x128xbf16>
    %c0_6 = arith.constant 0 : index
    %c0_7 = arith.constant 0 : index
    %10 = vector.load %arg4[%c0_6, %c0_7] : memref<128x128xbf16, #tpu.memory_space<vmem>>, vector<128x128xbf16>
    %cst_8 = arith.constant dense<0.000000e+00> : vector<128x128xf32>
    %11 = tpu.matmul %9, %10, %cst_8 {dimension_numbers = #tpu.dot_dimension_numbers<[1], [0], [0], [1], [0, 0, 1, 1], [], []>} : vector<128x128xbf16>, vector<128x128xbf16>, vector<128x128xf32> -> vector<128x128xf32>
    %c0_9 = arith.constant 0 : index
    %c0_10 = arith.constant 0 : index
    %12 = vector.load %arg5[%c0_9, %c0_10] : memref<1x128xf32, #tpu.memory_space<vmem>>, vector<1x128xf32>
    %13 = vector.broadcast %12 : vector<1x128xf32> to vector<128x128xf32>
    %14 = arith.addf %11, %13 : vector<128x128xf32>
    %cst_11 = arith.constant 0.000000e+00 : f32
    %15 = vector.broadcast %cst_11 : f32 to vector<128x128xf32>
    %16 = arith.maximumf %14, %15 : vector<128x128xf32>
    %17 = arith.truncf %16 : vector<128x128xf32> to vector<128x128xbf16>
    %c0_12 = arith.constant 0 : index
    %c0_13 = arith.constant 0 : index
    %18 = vector.load %arg6[%c0_12, %c0_13] : memref<128x128xbf16, #tpu.memory_space<vmem>>, vector<128x128xbf16>
    %cst_14 = arith.constant dense<0.000000e+00> : vector<128x128xf32>
    %19 = tpu.matmul %17, %18, %cst_14 {dimension_numbers = #tpu.dot_dimension_numbers<[1], [0], [0], [1], [0, 0, 1, 1], [], []>} : vector<128x128xbf16>, vector<128x128xbf16>, vector<128x128xf32> -> vector<128x128xf32>
    %c0_15 = arith.constant 0 : index
    %c0_16 = arith.constant 0 : index
    %20 = vector.load %arg7[%c0_15, %c0_16] : memref<1x128xf32, #tpu.memory_space<vmem>>, vector<1x128xf32>
    %21 = vector.broadcast %20 : vector<1x128xf32> to vector<128x128xf32>
    %22 = arith.addf %19, %21 : vector<128x128xf32>
    %cst_17 = arith.constant 0.000000e+00 : f32
    %23 = vector.broadcast %cst_17 : f32 to vector<128x128xf32>
    %24 = arith.maximumf %22, %23 : vector<128x128xf32>
    %25 = arith.truncf %24 : vector<128x128xf32> to vector<128x128xbf16>
    %c0_18 = arith.constant 0 : index
    %c0_19 = arith.constant 0 : index
    %26 = vector.load %arg8[%c0_18, %c0_19] : memref<1x128xbf16, #tpu.memory_space<vmem>>, vector<1x128xbf16>
    %cst_20 = arith.constant dense<0.000000e+00> : vector<1x128xf32>
    %27 = tpu.matmul %26, %25, %cst_20 {dimension_numbers = #tpu.dot_dimension_numbers<[1], [1], [0], [0], [0, 0, 1, 0], [], []>} : vector<1x128xbf16>, vector<128x128xbf16>, vector<1x128xf32> -> vector<1x128xf32>
    %c0_21 = arith.constant 0 : index
    %28 = memref.load %arg9[%c0_21] : memref<3xf32, #tpu.memory_space<smem>>
    %c1 = arith.constant 1 : index
    %29 = memref.load %arg9[%c1] : memref<3xf32, #tpu.memory_space<smem>>
    %c2 = arith.constant 2 : index
    %30 = memref.load %arg9[%c2] : memref<3xf32, #tpu.memory_space<smem>>
    %31 = vector.broadcast %28 : f32 to vector<1x128xf32>
    %32 = arith.addf %27, %31 : vector<1x128xf32>
    %cst_22 = arith.constant 1.000000e-03 : f32
    %33 = vector.broadcast %cst_22 : f32 to vector<1x128xf32>
    %34 = arith.mulf %32, %33 : vector<1x128xf32>
    %35 = arith.negf %34 : vector<1x128xf32>
    %36 = math.exp %35 : vector<1x128xf32>
    %cst_23 = arith.constant 1.000000e+00 : f32
    %37 = vector.broadcast %cst_23 : f32 to vector<1x128xf32>
    %38 = arith.addf %37, %36 : vector<1x128xf32>
    %39 = arith.divf %37, %38 : vector<1x128xf32>
    %40 = vector.broadcast %30 : f32 to vector<1x128xf32>
    %41 = arith.mulf %39, %40 : vector<1x128xf32>
    %42 = vector.broadcast %29 : f32 to vector<1x128xf32>
    %43 = arith.addf %41, %42 : vector<1x128xf32>
    %c0_24 = arith.constant 0 : index
    %c0_25 = arith.constant 0 : index
    %c0_26 = arith.constant 0 : index
    %44 = vector.load %arg10[%c0_24, %c0_25, %c0_26] : memref<1x1x128xf32, #tpu.memory_space<vmem>>, vector<1x1x128xf32>
    %45 = vector.shape_cast %44 : vector<1x1x128xf32> to vector<1x128xf32>
    %46 = vector.shape_cast %43 : vector<1x128xf32> to vector<1x1x128xf32>
    tpu.vector_store %arg10[%c0_24, %c0_25, %c0_26], %46 {strides = array<i32>} : memref<1x1x128xf32, #tpu.memory_space<vmem>>, vector<1x1x128xf32>,
    return
  }
  func.func @transform_0(%arg0: i32) -> (i32, i32) {
    %c0_i32 = arith.constant 0 : i32
    %c0_i32_0 = arith.constant 0 : i32
    return %arg0, %c0_i32 : i32, i32
  }
  func.func @transform_1(%arg0: i32) -> (i32, i32) {
    %c0_i32 = arith.constant 0 : i32
    %c0_i32_0 = arith.constant 0 : i32
    %c0_i32_1 = arith.constant 0 : i32
    return %c0_i32, %c0_i32_0 : i32, i32
  }
  func.func @transform_2(%arg0: i32) -> (i32, i32) {
    %c0_i32 = arith.constant 0 : i32
    %c0_i32_0 = arith.constant 0 : i32
    %c0_i32_1 = arith.constant 0 : i32
    return %c0_i32, %c0_i32_0 : i32, i32
  }
  func.func @transform_3(%arg0: i32) -> (i32, i32) {
    %c0_i32 = arith.constant 0 : i32
    %c0_i32_0 = arith.constant 0 : i32
    %c0_i32_1 = arith.constant 0 : i32
    return %c0_i32, %c0_i32_0 : i32, i32
  }
  func.func @transform_4(%arg0: i32) -> (i32, i32) {
    %c0_i32 = arith.constant 0 : i32
    %c0_i32_0 = arith.constant 0 : i32
    %c0_i32_1 = arith.constant 0 : i32
    return %c0_i32, %c0_i32_0 : i32, i32
  }
  func.func @transform_5(%arg0: i32) -> (i32, i32) {
    %c0_i32 = arith.constant 0 : i32
    %c0_i32_0 = arith.constant 0 : i32
    %c0_i32_1 = arith.constant 0 : i32
    return %c0_i32, %c0_i32_0 : i32, i32
  }
  func.func @transform_6(%arg0: i32) -> (i32, i32) {
    %c0_i32 = arith.constant 0 : i32
    %c0_i32_0 = arith.constant 0 : i32
    %c0_i32_1 = arith.constant 0 : i32
    return %c0_i32, %c0_i32_0 : i32, i32
  }
  func.func @transform_7(%arg0: i32) -> (i32, i32) {
    %c0_i32 = arith.constant 0 : i32
    %c0_i32_0 = arith.constant 0 : i32
    %c0_i32_1 = arith.constant 0 : i32
    return %c0_i32, %c0_i32_0 : i32, i32
  }
  func.func @transform_8(%arg0: i32) -> i32 {
    %c0_i32 = arith.constant 0 : i32
    %c0_i32_0 = arith.constant 0 : i32
    return %c0_i32 : i32
  }
  func.func @transform_9(%arg0: i32) -> (i32, i32, i32) {
    %c0_i32 = arith.constant 0 : i32
    %c0_i32_0 = arith.constant 0 : i32
    %c0_i32_1 = arith.constant 0 : i32
    return %arg0, %c0_i32, %c0_i32_0 : i32, i32, i32
  }
}

</mosaic_0001>

<llo_original>
// kernel: tpu_custom_call.1
$region0: #{tpu_custom_call.1}
  #allocation0 [shape = 'u32[]', space=smem, size = 0x4, offset = 0x4, fixed_abs, tag = 'smem constant byte address 0x4 - core index']
  #allocation1 [shape = 'u32[144,128]{1,0:T(1,128)}', space=vmem, size = 0x12000, scoped, tag = 'internal scratch']
  %s0 = inlined_call_operand.vmem [shape: f32[128,32], index: 0, kind: input, shape index: {}]
  %s1 = inlined_call_operand.vmem [shape: bf16[32,128], index: 1, kind: input, shape index: {}]
  %s2 = inlined_call_operand.vmem [shape: f32[1,128], index: 2, kind: input, shape index: {}]
  %s3 = inlined_call_operand.vmem [shape: bf16[128,128], index: 3, kind: input, shape index: {}]
  %s4 = inlined_call_operand.vmem [shape: f32[1,128], index: 4, kind: input, shape index: {}]
  %s5 = inlined_call_operand.vmem [shape: bf16[128,128], index: 5, kind: input, shape index: {}]
  %s6 = inlined_call_operand.vmem [shape: f32[1,128], index: 6, kind: input, shape index: {}]
  %s7 = inlined_call_operand.vmem [shape: bf16[1,128], index: 7, kind: input, shape index: {}]
  %s8 = inlined_call_operand.vmem [shape: f32[3], index: 8, kind: input, shape index: {}]
  %s9 = inlined_call_operand.hbm [shape: f32[1,1,128], index: 9, kind: output, shape index: {}]
  %s10 = sld [smem:[#allocation0]]
  $region50: #{tpu_custom_call.1} parent=0
    _
  %s12 = ssub.s32 1, %s10
  %s13 = scalar_select 0, %s12, %s10
  $region1: #{tpu_custom_call.1} parent=0
    #allocation2 [shape = 'u8[512]{0}', space=smem, size = 0x200, scoped, tag = 'input window, operand 8, single buffered']
    #allocation3 [shape = 's32[1]{0}', space=sflag, size = 0x4, scoped, tag = 'scoped memory for tpu_custom_call.1']
    #allocation4 [shape = 's32[1]{0}', space=sflag, size = 0x4, scoped, tag = 'scoped memory for tpu_custom_call.1']
    #allocation5 [shape = 'u8[512]{0}', space=vmem, size = 0x400, scoped, tag = 'output window, operand 0, single buffered']
    %14 = vsyncpa [#allocation4], 0
    %15 = vsyncpa [#allocation3], 0
    // Predicated region
    $region2: #{tpu_custom_call.1} parent=1 // pred_check
      _
    $region3: #{tpu_custom_call.1} parent=1 // pred_check_branch
      %17 = sbr.rel (0) target = $region5
    $region4: #{tpu_custom_call.1} parent=1 // pred_region
      _
    $region5: #{tpu_custom_call.1} parent=1 // pred_fallthru
      _
    // Predicated region
    $region6: #{tpu_custom_call.1} parent=1 // pred_check
      _
    $region7: #{tpu_custom_call.1} parent=1 // pred_check_branch
      %19 = sbr.rel (0) target = $region9
    $region8: #{tpu_custom_call.1} parent=1 // pred_region
      _
    $region9: #{tpu_custom_call.1} parent=1 // pred_fallthru
      _
    // Predicated region
    $region10: #{tpu_custom_call.1} parent=1 // pred_check
      _
    $region11: #{tpu_custom_call.1} parent=1 // pred_check_branch
      %21 = sbr.rel (0) target = $region13
    $region12: #{tpu_custom_call.1} parent=1 // pred_region
      _
    $region13: #{tpu_custom_call.1} parent=1 // pred_fallthru
      _
    // Predicated region
    $region14: #{tpu_custom_call.1} parent=1 // pred_check
      _
    $region15: #{tpu_custom_call.1} parent=1 // pred_check_branch
      %23 = sbr.rel (0) target = $region17
    $region16: #{tpu_custom_call.1} parent=1 // pred_region
      _
    $region17: #{tpu_custom_call.1} parent=1 // pred_fallthru
      _
    // Predicated region
    $region18: #{tpu_custom_call.1} parent=1 // pred_check
      _
    $region19: #{tpu_custom_call.1} parent=1 // pred_check_branch
      %25 = sbr.rel (0) target = $region21
    $region20: #{tpu_custom_call.1} parent=1 // pred_region
      _
    $region21: #{tpu_custom_call.1} parent=1 // pred_fallthru
      _
    // Predicated region
    $region22: #{tpu_custom_call.1} parent=1 // pred_check
      _
    $region23: #{tpu_custom_call.1} parent=1 // pred_check_branch
      %27 = sbr.rel (0) target = $region25
    $region24: #{tpu_custom_call.1} parent=1 // pred_region
      _
    $region25: #{tpu_custom_call.1} parent=1 // pred_fallthru
      _
    // Predicated region
    $region26: #{tpu_custom_call.1} parent=1 // pred_check
      _
    $region27: #{tpu_custom_call.1} parent=1 // pred_check_branch
      %29 = sbr.rel (0) target = $region29
    $region28: #{tpu_custom_call.1} parent=1 // pred_region
      _
    $region29: #{tpu_custom_call.1} parent=1 // pred_fallthru
      _
    // Predicated region
    $region30: #{tpu_custom_call.1} parent=1 // pred_check
      _
    $region31: #{tpu_custom_call.1} parent=1 // pred_check_branch
      %31 = sbr.rel (0) target = $region33
    $region32: #{tpu_custom_call.1} parent=1 // pred_region
      _
    $region33: #{tpu_custom_call.1} parent=1 // pred_fallthru
      _
    // Predicated region
    $region34: #{tpu_custom_call.1} parent=1 // pred_check
      _
    $region35: #{tpu_custom_call.1} parent=1 // pred_check_branch
      %33 = sbr.rel (0) target = $region37
    $region36: #{tpu_custom_call.1} parent=1 // pred_region
      %s35 = ssub.s32 16, 16
      %36 = vsyncadd [#allocation4], %s35
      %s38 = sshll.u32 %s8, 4
      %s39 = int_to_ptr.vmem [resolvable:$true] %s38
      %41 = dma.vmem_to_smem %s39, 16, [#allocation2], [#allocation4]
    $region37: #{tpu_custom_call.1} parent=1 // pred_fallthru
      _
    // Predicated region
    $region38: #{tpu_custom_call.1} parent=1 // pred_check
      _
    $region39: #{tpu_custom_call.1} parent=1 // pred_check_branch
      %43 = sbr.rel (0) target = $region41
    $region40: #{tpu_custom_call.1} parent=1 // pred_region
      %44 = dma.done [#allocation4], 16
    $region41: #{tpu_custom_call.1} parent=1 // pred_fallthru
      _
    %45 = sfence
    %v47 = vld [vmem:[%s0] sm:$0xff]
    %v48 = vld [vmem:[%s0 + $0x8] sm:$0xff]
    %v49 = vld [vmem:[%s0 + $0x10] sm:$0xff]
    %v50 = vld [vmem:[%s0 + $0x18] sm:$0xff]
    %v51 = vld [vmem:[%s0 + $0x20] sm:$0xff]
    %v52 = vld [vmem:[%s0 + $0x28] sm:$0xff]
    %v53 = vld [vmem:[%s0 + $0x30] sm:$0xff]
    %v54 = vld [vmem:[%s0 + $0x38] sm:$0xff]
    %v55 = vld [vmem:[%s0 + $0x40] sm:$0xff]
    %v56 = vld [vmem:[%s0 + $0x48] sm:$0xff]
    %v57 = vld [vmem:[%s0 + $0x50] sm:$0xff]
    %v58 = vld [vmem:[%s0 + $0x58] sm:$0xff]
    %v59 = vld [vmem:[%s0 + $0x60] sm:$0xff]
    %v60 = vld [vmem:[%s0 + $0x68] sm:$0xff]
    %v61 = vld [vmem:[%s0 + $0x70] sm:$0xff]
    %v62 = vld [vmem:[%s0 + $0x78] sm:$0xff]
    %v63 = vpack.c.bf16 %v48, %v47
    %v64 = vpack.c.bf16 %v50, %v49
    %v65 = vpack.c.bf16 %v52, %v51
    %v66 = vpack.c.bf16 %v54, %v53
    %v67 = vpack.c.bf16 %v56, %v55
    %v68 = vpack.c.bf16 %v58, %v57
    %v69 = vpack.c.bf16 %v60, %v59
    %v70 = vpack.c.bf16 %v62, %v61
    %v71 = vld [vmem:[%s1] sm:$0xf]
    %v72 = vld [vmem:[%s1 + $0x4] sm:$0xf]
    %v73 = vld [vmem:[%s1 + $0x8] sm:$0xf]
    %v74 = vld [vmem:[%s1 + $0xc] sm:$0xf]
    %v75 = vld [vmem:[%s2] sm:$0x1]
    %v77 = vlaneseq
    %v78 = vshrl.u32 %v77, 7
    %v79 = vsub.s32 0, %v78
    %v80 = vrot.slane %v75, %v79
    %v86 = vunpack.c.l.b16 %v71
    %v87 = vunpack.c.l.b16 %v72
    %v88 = vunpack.c.l.b16 %v73
    %v89 = vunpack.c.l.b16 %v74
    %v90 = vpack.c.b16 %v87, %v86
    %v91 = vpack.c.b16 %v89, %v88
    %vm94 = vcmask 261120
    %v96 = vsel %vm94, %v63, 0
    %v99 = vsel %vm94, %v64, 0
    %v102 = vsel %vm94, %v65, 0
    %v105 = vsel %vm94, %v66, 0
    %v108 = vsel %vm94, %v67, 0
    %v111 = vsel %vm94, %v68, 0
    %v114 = vsel %vm94, %v69, 0
    %v117 = vsel %vm94, %v70, 0
    %119 = vmatprep.subr.bf16.mxu0 0
    %120 = vmatpush1.bf16.msra.mxu0 %v90
    %121 = vmatprep.subr.bf16.mxu0 0
    %122 = vmatpush1.bf16.msra.mxu0 %v91
    %123 = vmatprep.subr.bf16.mxu0 0
    %124 = vmatpush1.bf16.msra.mxu0 0
    %125 = vmatprep.subr.bf16.mxu0 0
    %126 = vmatpush1.bf16.msra.mxu0 0
    %127 = vmatprep.subr.bf16.mxu0 0
    %128 = vmatpush1.bf16.msra.mxu0 0
    %129 = vmatprep.subr.bf16.mxu0 0
    %130 = vmatpush1.bf16.msra.mxu0 0
    %131 = vmatprep.subr.bf16.mxu0 0
    %132 = vmatpush1.bf16.msra.mxu0 0
    %133 = vmatprep.subr.bf16.mxu0 0
    %134 = vmatpush1.bf16.msra.mxu0 0
    %135 = vmatprep.subr.bf16.mxu0 0
    %136 = vmatpush1.bf16.msra.mxu0 0
    %137 = vmatprep.subr.bf16.mxu0 0
    %138 = vmatpush1.bf16.msra.mxu0 0
    %139 = vmatprep.subr.bf16.mxu0 0
    %140 = vmatpush1.bf16.msra.mxu0 0
    %141 = vmatprep.subr.bf16.mxu0 0
    %142 = vmatpush1.bf16.msra.mxu0 0
    %143 = vmatprep.subr.bf16.mxu0 0
    %144 = vmatpush1.bf16.msra.mxu0 0
    %145 = vmatprep.subr.bf16.mxu0 0
    %146 = vmatpush1.bf16.msra.mxu0 0
    %147 = vmatprep.subr.bf16.mxu0 0
    %148 = vmatpush1.bf16.msra.mxu0 0
    %149 = vmatprep.subr.bf16.mxu0 0
    %150 = vmatpush1.bf16.msra.mxu0 0
    %151 = vmatprep.mubr.bf16.mxu0 0
    %152 = vmatmul.mubr.bf16.gmra.mrb[0].mxu0 %v96
    %v153 = vpop.f32.mrb[0].mxu0
    %v154 = vadd.f32 %v80, %v153
    %v155 = vpop.f32.mrb[0].mxu0
    %v156 = vpop.f32.mrb[0].mxu0
    %v157 = vadd.f32 %v80, %v156
    %v158 = vpop.f32.mrb[0].mxu0
    %159 = vmatprep.mubr.bf16.mxu0 0
    %160 = vmatmul.mubr.bf16.gmra.mrb[0].mxu0 %v99
    %v161 = vpop.f32.mrb[0].mxu0
    %v162 = vadd.f32 %v80, %v161
    %v163 = vpop.f32.mrb[0].mxu0
    %v164 = vpop.f32.mrb[0].mxu0
    %v165 = vadd.f32 %v80, %v164
    %v166 = vpop.f32.mrb[0].mxu0
    %167 = vmatprep.mubr.bf16.mxu0 0
    %168 = vmatmul.mubr.bf16.gmra.mrb[0].mxu0 %v102
    %v169 = vpop.f32.mrb[0].mxu0
    %v170 = vadd.f32 %v80, %v169
    %v171 = vpop.f32.mrb[0].mxu0
    %v172 = vpop.f32.mrb[0].mxu0
    %v173 = vadd.f32 %v80, %v172
    %v174 = vpop.f32.mrb[0].mxu0
    %175 = vmatprep.mubr.bf16.mxu0 0
    %176 = vmatmul.mubr.bf16.gmra.mrb[0].mxu0 %v105
    %v177 = vpop.f32.mrb[0].mxu0
    %v178 = vadd.f32 %v80, %v177
    %v179 = vpop.f32.mrb[0].mxu0
    %v180 = vpop.f32.mrb[0].mxu0
    %v181 = vadd.f32 %v80, %v180
    %v182 = vpop.f32.mrb[0].mxu0
    %183 = vmatprep.mubr.bf16.mxu0 0
    %184 = vmatmul.mubr.bf16.gmra.mrb[0].mxu0 %v108
    %v185 = vpop.f32.mrb[0].mxu0
    %v186 = vadd.f32 %v80, %v185
    %v187 = vpop.f32.mrb[0].mxu0
    %v188 = vpop.f32.mrb[0].mxu0
    %v189 = vadd.f32 %v80, %v188
    %v190 = vpop.f32.mrb[0].mxu0
    %191 = vmatprep.mubr.bf16.mxu0 0
    %192 = vmatmul.mubr.bf16.gmra.mrb[0].mxu0 %v111
    %v193 = vpop.f32.mrb[0].mxu0
    %v194 = vadd.f32 %v80, %v193
    %v195 = vpop.f32.mrb[0].mxu0
    %v196 = vpop.f32.mrb[0].mxu0
    %v197 = vadd.f32 %v80, %v196
    %v198 = vpop.f32.mrb[0].mxu0
    %199 = vmatprep.mubr.bf16.mxu0 0
    %200 = vmatmul.mubr.bf16.gmra.mrb[0].mxu0 %v114
    %v201 = vpop.f32.mrb[0].mxu0
    %v202 = vadd.f32 %v80, %v201
    %v203 = vpop.f32.mrb[0].mxu0
    %v204 = vpop.f32.mrb[0].mxu0
    %v205 = vadd.f32 %v80, %v204
    %v206 = vpop.f32.mrb[0].mxu0
    %207 = vmatprep.mubr.bf16.mxu0 0
    %208 = vmatmul.mubr.bf16.gmra.mrb[0].mxu0 %v117
    %v209 = vpop.f32.mrb[0].mxu0
    %v210 = vadd.f32 %v80, %v209
    %v211 = vpop.f32.mrb[0].mxu0
    %v212 = vpop.f32.mrb[0].mxu0
    %v213 = vadd.f32 %v80, %v212
    %v214 = vpop.f32.mrb[0].mxu0
    %215 = vdwg.mxu0
    %v216 = vmax.f32 %v154, 0.0
    %v217 = vmax.f32 %v157, 0.0
    %v218 = vmax.f32 %v162, 0.0
    %v219 = vmax.f32 %v165, 0.0
    %v220 = vmax.f32 %v170, 0.0
    %v221 = vmax.f32 %v173, 0.0
    %v222 = vmax.f32 %v178, 0.0
    %v223 = vmax.f32 %v181, 0.0
    %v224 = vmax.f32 %v186, 0.0
    %v225 = vmax.f32 %v189, 0.0
    %v226 = vmax.f32 %v194, 0.0
    %v227 = vmax.f32 %v197, 0.0
    %v228 = vmax.f32 %v202, 0.0
    %v229 = vmax.f32 %v205, 0.0
    %v230 = vmax.f32 %v210, 0.0
    %v231 = vmax.f32 %v213, 0.0
    %v232 = vpack.c.bf16 %v217, %v216
    %v233 = vpack.c.bf16 %v219, %v218
    %v234 = vpack.c.bf16 %v221, %v220
    %v235 = vpack.c.bf16 %v223, %v222
    %v236 = vpack.c.bf16 %v225, %v224
    %v237 = vpack.c.bf16 %v227, %v226
    %v238 = vpack.c.bf16 %v229, %v228
    %v239 = vpack.c.bf16 %v231, %v230
    %v240 = vld [vmem:[%s3] sm:$0xf]
    %v241 = vld [vmem:[%s3 + $0x4] sm:$0xf]
    %v242 = vld [vmem:[%s3 + $0x8] sm:$0xf]
    %v243 = vld [vmem:[%s3 + $0xc] sm:$0xf]
    %v244 = vld [vmem:[%s3 + $0x10] sm:$0xf]
    %v245 = vld [vmem:[%s3 + $0x14] sm:$0xf]
    %v246 = vld [vmem:[%s3 + $0x18] sm:$0xf]
    %v247 = vld [vmem:[%s3 + $0x1c] sm:$0xf]
    %v248 = vld [vmem:[%s3 + $0x20] sm:$0xf]
    %v249 = vld [vmem:[%s3 + $0x24] sm:$0xf]
    %v250 = vld [vmem:[%s3 + $0x28] sm:$0xf]
    %v251 = vld [vmem:[%s3 + $0x2c] sm:$0xf]
    %v252 = vld [vmem:[%s3 + $0x30] sm:$0xf]
    %v253 = vld [vmem:[%s3 + $0x34] sm:$0xf]
    %v254 = vld [vmem:[%s3 + $0x38] sm:$0xf]
    %v255 = vld [vmem:[%s3 + $0x3c] sm:$0xf]
    %v256 = vld [vmem:[%s4] sm:$0x1]
    %v258 = vlaneseq
    %v259 = vshrl.u32 %v258, 7
    %v260 = vsub.s32 0, %v259
    %v261 = vrot.slane %v256, %v260
    %v279 = vunpack.c.l.b16 %v240
    %v280 = vunpack.c.l.b16 %v241
    %v281 = vunpack.c.l.b16 %v242
    %v282 = vunpack.c.l.b16 %v243
    %v283 = vunpack.c.l.b16 %v244
    %v284 = vunpack.c.l.b16 %v245
    %v285 = vunpack.c.l.b16 %v246
    %v286 = vunpack.c.l.b16 %v247
    %v287 = vunpack.c.l.b16 %v248
    %v288 = vunpack.c.l.b16 %v249
    %v289 = vunpack.c.l.b16 %v250
    %v290 = vunpack.c.l.b16 %v251
    %v291 = vunpack.c.l.b16 %v252
    %v292 = vunpack.c.l.b16 %v253
    %v293 = vunpack.c.l.b16 %v254
    %v294 = vunpack.c.l.b16 %v255
    %v295 = vpack.c.b16 %v280, %v279
    %v296 = vpack.c.b16 %v282, %v281
    %v297 = vpack.c.b16 %v284, %v283
    %v298 = vpack.c.b16 %v286, %v285
    %v299 = vpack.c.b16 %v288, %v287
    %v300 = vpack.c.b16 %v290, %v289
    %v301 = vpack.c.b16 %v292, %v291
    %v302 = vpack.c.b16 %v294, %v293
    %311 = vmatprep.subr.bf16.mxu0 0
    %312 = vmatpush1.bf16.msra.mxu0 %v295
    %313 = vmatprep.subr.bf16.mxu0 0
    %314 = vmatpush1.bf16.msra.mxu0 %v296
    %315 = vmatprep.subr.bf16.mxu0 0
    %316 = vmatpush1.bf16.msra.mxu0 %v297
    %317 = vmatprep.subr.bf16.mxu0 0
    %318 = vmatpush1.bf16.msra.mxu0 %v298
    %319 = vmatprep.subr.bf16.mxu0 0
    %320 = vmatpush1.bf16.msra.mxu0 %v299
    %321 = vmatprep.subr.bf16.mxu0 0
    %322 = vmatpush1.bf16.msra.mxu0 %v300
    %323 = vmatprep.subr.bf16.mxu0 0
    %324 = vmatpush1.bf16.msra.mxu0 %v301
    %325 = vmatprep.subr.bf16.mxu0 0
    %326 = vmatpush1.bf16.msra.mxu0 %v302
    %327 = vmatprep.subr.bf16.mxu0 0
    %328 = vmatpush1.bf16.msra.mxu0 0
    %329 = vmatprep.subr.bf16.mxu0 0
    %330 = vmatpush1.bf16.msra.mxu0 0
    %331 = vmatprep.subr.bf16.mxu0 0
    %332 = vmatpush1.bf16.msra.mxu0 0
    %333 = vmatprep.subr.bf16.mxu0 0
    %334 = vmatpush1.bf16.msra.mxu0 0
    %335 = vmatprep.subr.bf16.mxu0 0
    %336 = vmatpush1.bf16.msra.mxu0 0
    %337 = vmatprep.subr.bf16.mxu0 0
    %338 = vmatpush1.bf16.msra.mxu0 0
    %339 = vmatprep.subr.bf16.mxu0 0
    %340 = vmatpush1.bf16.msra.mxu0 0
    %341 = vmatprep.subr.bf16.mxu0 0
    %342 = vmatpush1.bf16.msra.mxu0 0
    %343 = vmatprep.mubr.bf16.mxu0 0
    %344 = vmatmul.mubr.bf16.gmra.mrb[0].mxu0 %v232
    %v345 = vpop.f32.mrb[0].mxu0
    %v346 = vadd.f32 %v261, %v345
    %v347 = vpop.f32.mrb[0].mxu0
    %v348 = vpop.f32.mrb[0].mxu0
    %v349 = vadd.f32 %v261, %v348
    %v350 = vpop.f32.mrb[0].mxu0
    %351 = vmatprep.mubr.bf16.mxu0 0
    %352 = vmatmul.mubr.bf16.gmra.mrb[0].mxu0 %v233
    %v353 = vpop.f32.mrb[0].mxu0
    %v354 = vadd.f32 %v261, %v353
    %v355 = vpop.f32.mrb[0].mxu0
    %v356 = vpop.f32.mrb[0].mxu0
    %v357 = vadd.f32 %v261, %v356
    %v358 = vpop.f32.mrb[0].mxu0
    %359 = vmatprep.mubr.bf16.mxu0 0
    %360 = vmatmul.mubr.bf16.gmra.mrb[0].mxu0 %v234
    %v361 = vpop.f32.mrb[0].mxu0
    %v362 = vadd.f32 %v261, %v361
    %v363 = vpop.f32.mrb[0].mxu0
    %v364 = vpop.f32.mrb[0].mxu0
    %v365 = vadd.f32 %v261, %v364
    %v366 = vpop.f32.mrb[0].mxu0
    %367 = vmatprep.mubr.bf16.mxu0 0
    %368 = vmatmul.mubr.bf16.gmra.mrb[0].mxu0 %v235
    %v369 = vpop.f32.mrb[0].mxu0
    %v370 = vadd.f32 %v261, %v369
    %v371 = vpop.f32.mrb[0].mxu0
    %v372 = vpop.f32.mrb[0].mxu0
    %v373 = vadd.f32 %v261, %v372
    %v374 = vpop.f32.mrb[0].mxu0
    %375 = vmatprep.mubr.bf16.mxu0 0
    %376 = vmatmul.mubr.bf16.gmra.mrb[0].mxu0 %v236
    %v377 = vpop.f32.mrb[0].mxu0
    %v378 = vadd.f32 %v261, %v377
    %v379 = vpop.f32.mrb[0].mxu0
    %v380 = vpop.f32.mrb[0].mxu0
    %v381 = vadd.f32 %v261, %v380
    %v382 = vpop.f32.mrb[0].mxu0
    %383 = vmatprep.mubr.bf16.mxu0 0
    %384 = vmatmul.mubr.bf16.gmra.mrb[0].mxu0 %v237
    %v385 = vpop.f32.mrb[0].mxu0
    %v386 = vadd.f32 %v261, %v385
    %v387 = vpop.f32.mrb[0].mxu0
    %v388 = vpop.f32.mrb[0].mxu0
    %v389 = vadd.f32 %v261, %v388
    %v390 = vpop.f32.mrb[0].mxu0
    %391 = vmatprep.mubr.bf16.mxu0 0
    %392 = vmatmul.mubr.bf16.gmra.mrb[0].mxu0 %v238
    %v393 = vpop.f32.mrb[0].mxu0
    %v394 = vadd.f32 %v261, %v393
    %v395 = vpop.f32.mrb[0].mxu0
    %v396 = vpop.f32.mrb[0].mxu0
    %v397 = vadd.f32 %v261, %v396
    %v398 = vpop.f32.mrb[0].mxu0
    %399 = vmatprep.mubr.bf16.mxu0 0
    %400 = vmatmul.mubr.bf16.gmra.mrb[0].mxu0 %v239
    %v401 = vpop.f32.mrb[0].mxu0
    %v402 = vadd.f32 %v261, %v401
    %v403 = vpop.f32.mrb[0].mxu0
    %v404 = vpop.f32.mrb[0].mxu0
    %v405 = vadd.f32 %v261, %v404
    %v406 = vpop.f32.mrb[0].mxu0
    %407 = vdwg.mxu0
    %v408 = vmax.f32 %v346, 0.0
    %v409 = vmax.f32 %v349, 0.0
    %v410 = vmax.f32 %v354, 0.0
    %v411 = vmax.f32 %v357, 0.0
    %v412 = vmax.f32 %v362, 0.0
    %v413 = vmax.f32 %v365, 0.0
    %v414 = vmax.f32 %v370, 0.0
    %v415 = vmax.f32 %v373, 0.0
    %v416 = vmax.f32 %v378, 0.0
    %v417 = vmax.f32 %v381, 0.0
    %v418 = vmax.f32 %v386, 0.0
    %v419 = vmax.f32 %v389, 0.0
    %v420 = vmax.f32 %v394, 0.0
    %v421 = vmax.f32 %v397, 0.0
    %v422 = vmax.f32 %v402, 0.0
    %v423 = vmax.f32 %v405, 0.0
    %v424 = vpack.c.bf16 %v409, %v408
    %v425 = vpack.c.bf16 %v411, %v410
    %v426 = vpack.c.bf16 %v413, %v412
    %v427 = vpack.c.bf16 %v415, %v414
    %v428 = vpack.c.bf16 %v417, %v416
    %v429 = vpack.c.bf16 %v419, %v418
    %v430 = vpack.c.bf16 %v421, %v420
    %v431 = vpack.c.bf16 %v423, %v422
    %v432 = vld [vmem:[%s5] sm:$0xf]
    %v433 = vld [vmem:[%s5 + $0x4] sm:$0xf]
    %v434 = vld [vmem:[%s5 + $0x8] sm:$0xf]
    %v435 = vld [vmem:[%s5 + $0xc] sm:$0xf]
    %v436 = vld [vmem:[%s5 + $0x10] sm:$0xf]
    %v437 = vld [vmem:[%s5 + $0x14] sm:$0xf]
    %v438 = vld [vmem:[%s5 + $0x18] sm:$0xf]
    %v439 = vld [vmem:[%s5 + $0x1c] sm:$0xf]
    %v440 = vld [vmem:[%s5 + $0x20] sm:$0xf]
    %v441 = vld [vmem:[%s5 + $0x24] sm:$0xf]
    %v442 = vld [vmem:[%s5 + $0x28] sm:$0xf]
    %v443 = vld [vmem:[%s5 + $0x2c] sm:$0xf]
    %v444 = vld [vmem:[%s5 + $0x30] sm:$0xf]
    %v445 = vld [vmem:[%s5 + $0x34] sm:$0xf]
    %v446 = vld [vmem:[%s5 + $0x38] sm:$0xf]
    %v447 = vld [vmem:[%s5 + $0x3c] sm:$0xf]
    %v448 = vld [vmem:[%s6] sm:$0x1]
    %v450 = vlaneseq
    %v451 = vshrl.u32 %v450, 7
    %v452 = vsub.s32 0, %v451
    %v453 = vrot.slane %v448, %v452
    %v471 = vunpack.c.l.b16 %v432
    %v472 = vunpack.c.l.b16 %v433
    %v473 = vunpack.c.l.b16 %v434
    %v474 = vunpack.c.l.b16 %v435
    %v475 = vunpack.c.l.b16 %v436
    %v476 = vunpack.c.l.b16 %v437
    %v477 = vunpack.c.l.b16 %v438
    %v478 = vunpack.c.l.b16 %v439
    %v479 = vunpack.c.l.b16 %v440
    %v480 = vunpack.c.l.b16 %v441
    %v481 = vunpack.c.l.b16 %v442
    %v482 = vunpack.c.l.b16 %v443
    %v483 = vunpack.c.l.b16 %v444
    %v484 = vunpack.c.l.b16 %v445
    %v485 = vunpack.c.l.b16 %v446
    %v486 = vunpack.c.l.b16 %v447
    %v487 = vpack.c.b16 %v472, %v471
    %v488 = vpack.c.b16 %v474, %v473
    %v489 = vpack.c.b16 %v476, %v475
    %v490 = vpack.c.b16 %v478, %v477
    %v491 = vpack.c.b16 %v480, %v479
    %v492 = vpack.c.b16 %v482, %v481
    %v493 = vpack.c.b16 %v484, %v483
    %v494 = vpack.c.b16 %v486, %v485
    %503 = vmatprep.subr.bf16.mxu0 0
    %504 = vmatpush1.bf16.msra.mxu0 %v487
    %505 = vmatprep.subr.bf16.mxu0 0
    %506 = vmatpush1.bf16.msra.mxu0 %v488
    %507 = vmatprep.subr.bf16.mxu0 0
    %508 = vmatpush1.bf16.msra.mxu0 %v489
    %509 = vmatprep.subr.bf16.mxu0 0
    %510 = vmatpush1.bf16.msra.mxu0 %v490
    %511 = vmatprep.subr.bf16.mxu0 0
    %512 = vmatpush1.bf16.msra.mxu0 %v491
    %513 = vmatprep.subr.bf16.mxu0 0
    %514 = vmatpush1.bf16.msra.mxu0 %v492
    %515 = vmatprep.subr.bf16.mxu0 0
    %516 = vmatpush1.bf16.msra.mxu0 %v493
    %517 = vmatprep.subr.bf16.mxu0 0
    %518 = vmatpush1.bf16.msra.mxu0 %v494
    %519 = vmatprep.subr.bf16.mxu0 0
    %520 = vmatpush1.bf16.msra.mxu0 0
    %521 = vmatprep.subr.bf16.mxu0 0
    %522 = vmatpush1.bf16.msra.mxu0 0
    %523 = vmatprep.subr.bf16.mxu0 0
    %524 = vmatpush1.bf16.msra.mxu0 0
    %525 = vmatprep.subr.bf16.mxu0 0
    %526 = vmatpush1.bf16.msra.mxu0 0
    %527 = vmatprep.subr.bf16.mxu0 0
    %528 = vmatpush1.bf16.msra.mxu0 0
    %529 = vmatprep.subr.bf16.mxu0 0
    %530 = vmatpush1.bf16.msra.mxu0 0
    %531 = vmatprep.subr.bf16.mxu0 0
    %532 = vmatpush1.bf16.msra.mxu0 0
    %533 = vmatprep.subr.bf16.mxu0 0
    %534 = vmatpush1.bf16.msra.mxu0 0
    %535 = vmatprep.mubr.bf16.mxu0 0
    %536 = vmatmul.mubr.bf16.gmra.mrb[0].mxu0 %v424
    %v537 = vpop.f32.mrb[0].mxu0
    %v538 = vadd.f32 %v453, %v537
    %v539 = vpop.f32.mrb[0].mxu0
    %v540 = vpop.f32.mrb[0].mxu0
    %v541 = vadd.f32 %v453, %v540
    %v542 = vpop.f32.mrb[0].mxu0
    %543 = vmatprep.mubr.bf16.mxu0 0
    %544 = vmatmul.mubr.bf16.gmra.mrb[0].mxu0 %v425
    %v545 = vpop.f32.mrb[0].mxu0
    %v546 = vadd.f32 %v453, %v545
    %v547 = vpop.f32.mrb[0].mxu0
    %v548 = vpop.f32.mrb[0].mxu0
    %v549 = vadd.f32 %v453, %v548
    %v550 = vpop.f32.mrb[0].mxu0
    %551 = vmatprep.mubr.bf16.mxu0 0
    %552 = vmatmul.mubr.bf16.gmra.mrb[0].mxu0 %v426
    %v553 = vpop.f32.mrb[0].mxu0
    %v554 = vadd.f32 %v453, %v553
    %v555 = vpop.f32.mrb[0].mxu0
    %v556 = vpop.f32.mrb[0].mxu0
    %v557 = vadd.f32 %v453, %v556
    %v558 = vpop.f32.mrb[0].mxu0
    %559 = vmatprep.mubr.bf16.mxu0 0
    %560 = vmatmul.mubr.bf16.gmra.mrb[0].mxu0 %v427
    %v561 = vpop.f32.mrb[0].mxu0
    %v562 = vadd.f32 %v453, %v561
    %v563 = vpop.f32.mrb[0].mxu0
    %v564 = vpop.f32.mrb[0].mxu0
    %v565 = vadd.f32 %v453, %v564
    %v566 = vpop.f32.mrb[0].mxu0
    %567 = vmatprep.mubr.bf16.mxu0 0
    %568 = vmatmul.mubr.bf16.gmra.mrb[0].mxu0 %v428
    %v569 = vpop.f32.mrb[0].mxu0
    %v570 = vadd.f32 %v453, %v569
    %v571 = vpop.f32.mrb[0].mxu0
    %v572 = vpop.f32.mrb[0].mxu0
    %v573 = vadd.f32 %v453, %v572
    %v574 = vpop.f32.mrb[0].mxu0
    %575 = vmatprep.mubr.bf16.mxu0 0
    %576 = vmatmul.mubr.bf16.gmra.mrb[0].mxu0 %v429
    %v577 = vpop.f32.mrb[0].mxu0
    %v578 = vadd.f32 %v453, %v577
    %v579 = vpop.f32.mrb[0].mxu0
    %v580 = vpop.f32.mrb[0].mxu0
    %v581 = vadd.f32 %v453, %v580
    %v582 = vpop.f32.mrb[0].mxu0
    %583 = vmatprep.mubr.bf16.mxu0 0
    %584 = vmatmul.mubr.bf16.gmra.mrb[0].mxu0 %v430
    %v585 = vpop.f32.mrb[0].mxu0
    %v586 = vadd.f32 %v453, %v585
    %v587 = vpop.f32.mrb[0].mxu0
    %v588 = vpop.f32.mrb[0].mxu0
    %v589 = vadd.f32 %v453, %v588
    %v590 = vpop.f32.mrb[0].mxu0
    %591 = vmatprep.mubr.bf16.mxu0 0
    %592 = vmatmul.mubr.bf16.gmra.mrb[0].mxu0 %v431
    %v593 = vpop.f32.mrb[0].mxu0
    %v594 = vadd.f32 %v453, %v593
    %v595 = vpop.f32.mrb[0].mxu0
    %v596 = vpop.f32.mrb[0].mxu0
    %v597 = vadd.f32 %v453, %v596
    %v598 = vpop.f32.mrb[0].mxu0
    %599 = vdwg.mxu0
    %v600 = vmax.f32 %v538, 0.0
    %v601 = vmax.f32 %v541, 0.0
    %v602 = vmax.f32 %v546, 0.0
    %v603 = vmax.f32 %v549, 0.0
    %v604 = vmax.f32 %v554, 0.0
    %v605 = vmax.f32 %v557, 0.0
    %v606 = vmax.f32 %v562, 0.0
    %v607 = vmax.f32 %v565, 0.0
    %v608 = vmax.f32 %v570, 0.0
    %v609 = vmax.f32 %v573, 0.0
    %v610 = vmax.f32 %v578, 0.0
    %v611 = vmax.f32 %v581, 0.0
    %v612 = vmax.f32 %v586, 0.0
    %v613 = vmax.f32 %v589, 0.0
    %v614 = vmax.f32 %v594, 0.0
    %v615 = vmax.f32 %v597, 0.0
    %v616 = vpack.c.bf16 %v601, %v600
    %v617 = vpack.c.bf16 %v603, %v602
    %v618 = vpack.c.bf16 %v605, %v604
    %v619 = vpack.c.bf16 %v607, %v606
    %v620 = vpack.c.bf16 %v609, %v608
    %v621 = vpack.c.bf16 %v611, %v610
    %v622 = vpack.c.bf16 %v613, %v612
    %v623 = vpack.c.bf16 %v615, %v614
    %v624 = vld [vmem:[%s7] sm:$0x1]
    %s625 = sld [smem:[#allocation2]]
    %s626 = sld [smem:[#allocation2 + $0x1]]
    %s627 = sld [smem:[#allocation2 + $0x2]]
    %v628 = vstv %s625
    %629 = vmatprep.subr.bf16.mxu0 0
    %630 = vmatpush1.bf16.xpose.msra.mxu0 %v616
    %631 = vmatprep.subr.bf16.mxu0 0
    %632 = vmatpush1.bf16.xpose.msra.mxu0 %v617
    %633 = vmatprep.subr.bf16.mxu0 0
    %634 = vmatpush1.bf16.xpose.msra.mxu0 %v618
    %635 = vmatprep.subr.bf16.mxu0 0
    %636 = vmatpush1.bf16.xpose.msra.mxu0 %v619
    %637 = vmatprep.subr.bf16.mxu0 0
    %638 = vmatpush1.bf16.xpose.msra.mxu0 %v620
    %639 = vmatprep.subr.bf16.mxu0 0
    %640 = vmatpush1.bf16.xpose.msra.mxu0 %v621
    %641 = vmatprep.subr.bf16.mxu0 0
    %642 = vmatpush1.bf16.xpose.msra.mxu0 %v622
    %643 = vmatprep.subr.bf16.mxu0 0
    %644 = vmatpush1.bf16.xpose.msra.mxu0 %v623
    %645 = vmatprep.subr.bf16.mxu0 0
    %646 = vmatpush1.bf16.xpose.msra.mxu0 0
    %647 = vmatprep.subr.bf16.mxu0 0
    %648 = vmatpush1.bf16.xpose.msra.mxu0 0
    %649 = vmatprep.subr.bf16.mxu0 0
    %650 = vmatpush1.bf16.xpose.msra.mxu0 0
    %651 = vmatprep.subr.bf16.mxu0 0
    %652 = vmatpush1.bf16.xpose.msra.mxu0 0
    %653 = vmatprep.subr.bf16.mxu0 0
    %654 = vmatpush1.bf16.xpose.msra.mxu0 0
    %655 = vmatprep.subr.bf16.mxu0 0
    %656 = vmatpush1.bf16.xpose.msra.mxu0 0
    %657 = vmatprep.subr.bf16.mxu0 0
    %658 = vmatpush1.bf16.xpose.msra.mxu0 0
    %659 = vmatprep.subr.bf16.mxu0 0
    %660 = vmatpush1.bf16.xpose.msra.mxu0 0
    %661 = vmatprep.mubr.bf16.mxu0 0
    %662 = vmatmul.mubr.bf16.gmra.mrb[0].mxu0 %v624
    %v663 = vpop.f32.mrb[0].mxu0
    %v664 = vadd.f32 %v628, %v663
    %v665 = vpop.f32.mrb[0].mxu0
    %v666 = vpop.f32.mrb[0].mxu0
    %v667 = vpop.f32.mrb[0].mxu0
    %668 = vdwg.mxu0
    %v669 = vmul.f32 %v664, 0.001
    %v670 = vxor.u32 %v669, 2147483648
    %v671 = vmul.f32 %v670, 1.442695
    %v672 = vpow.pop %v671
    %v673 = vadd.f32 %v672, 1.0
    %v674 = vrcp.pop %v673
    %v675 = vmul.f32 1.0, %v674
    %v676 = vstv %s627
    %v677 = vmul.f32 %v675, %v676
    %v678 = vstv %s626
    %v679 = vadd.f32 %v677, %v678
    %680 = vst [vmem:[#allocation5] sm:$0x1] %v679
    // Predicated region
    $region42: #{tpu_custom_call.1} parent=1 // pred_check
      _
    $region43: #{tpu_custom_call.1} parent=1 // pred_check_branch
      %682 = sbr.rel (0) target = $region45
    $region44: #{tpu_custom_call.1} parent=1 // pred_region
      %s684 = ssub.s32 16, 16
      %685 = vsyncadd [#allocation3], %s684
      %s687 = sshll.u32 [#allocation5], 4
      %s688 = int_to_ptr.vmem [resolvable:$true] %s687
      %690 = dma.vmem_to_hbm [thread:$0]  %s688, 16, %s9, [#allocation3]
    $region45: #{tpu_custom_call.1} parent=1 // pred_fallthru
      _
    // Predicated region
    $region46: #{tpu_custom_call.1} parent=1 // pred_check
      _
    $region47: #{tpu_custom_call.1} parent=1 // pred_check_branch
      %692 = sbr.rel (0) target = $region49
    $region48: #{tpu_custom_call.1} parent=1 // pred_region
      %693 = dma.done [#allocation3], 16
    $region49: #{tpu_custom_call.1} parent=1 // pred_fallthru
      _
    %694 = vsyncpa [#allocation3], 1
    %695 = vsyncpa [#allocation4], 1

</llo_original>
